<compile_context>
chip_gen: v6e
topology: v6e:2x2x1
jax: 0.10.0
libtpu: 0.0.40
codegen_flags: <defaults>
</compile_context>

<pallas_src>
import functools

import jax
import jax.numpy as jnp
from jax.experimental import pallas as pl
from jax.experimental.pallas import tpu as pltpu


def _round_up(x, m):
    return (x + m - 1) // m * m


# -----------------------------------------------------------------------------
# Pallas kernel: fused im2col + (W1 @ slab + b1) -> ReLU -> (W2 @ h + b2)
# in the transposed (M-on-lanes) formulation, single K=9*C contraction.
# -----------------------------------------------------------------------------
def _head_kernel(x_ref, w1_ref, b1_ref, w2_ref, b2_ref, o_ref, slab_ref, *, wp):
    # x_ref:    (C, L)        bf16 — zero-padded, flattened spatial (one image)
    # w1_ref:   (HID, 9*C)    bf16 — 3x3 taps flattened onto the contraction axis
    # b1_ref:   (HID, 1)      f32
    # w2_ref:   (NCLS, HID)   bf16
    # b2_ref:   (NCLS, 1)     f32
    # o_ref:    (NCLS, M_pad) bf16 — M_pad multiple of 128 (lane-dense stores)
    # slab_ref: (9*C, M_pad)  bf16 — VMEM scratch for the fused-im2col slab
    c = x_ref.shape[0]
    m_pad = o_ref.shape[-1]

    # Fused im2col: pack the 9 statically-shifted taps on the contraction
    # (sublane) axis so the 3x3 conv becomes ONE K=9*C MXU matmul instead of
    # nine K=C matmuls plus eight f32 VPU accumulates.
    for k in range(9):
        ky, kx = k // 3, k % 3
        off = ky * wp + kx                              # static lane offset
        slab_ref[k * c:(k + 1) * c, :] = x_ref[:, off:off + m_pad]

    acc = jnp.dot(w1_ref[...], slab_ref[...],
                  preferred_element_type=jnp.float32)    # (HID, M_pad) f32

    # Epilogue in f32 (v5e has no bf16 VPU path); downcast only for the MXU.
    h = jnp.maximum(acc + b1_ref[...], 0.0)              # (HID, M_pad) f32
    y = jnp.dot(w2_ref[...], h.astype(w2_ref.dtype),
                preferred_element_type=jnp.float32)      # (NCLS, M_pad) f32
    o_ref[...] = (y + b2_ref[...]).astype(o_ref.dtype)   # bf16 writeback


def _fused_head(xf, w1f, b1, w2, b2, *, wp, m_pad):
    """xf: [N, C, L] bf16 -> [N, NCLS, M_pad] bf16 fused conv head."""
    n, c, l_total = xf.shape
    hid = w1f.shape[0]
    ncls = w2.shape[0]

    flops = 2 * n * m_pad * (9 * c * hid + hid * ncls)
    bytes_accessed = int(
        xf.size * 2 + n * ncls * m_pad * 2
        + w1f.size * 2 + w2.size * 2 + b1.size * 4 + b2.size * 4
    )

    kernel = functools.partial(_head_kernel, wp=wp)
    return pl.pallas_call(
        kernel,
        out_shape=jax.ShapeDtypeStruct((n, ncls, m_pad), jnp.bfloat16),
        grid_spec=pltpu.PrefetchScalarGridSpec(
            num_scalar_prefetch=0,
            grid=(n,),
            in_specs=[
                pl.BlockSpec((None, c, l_total), lambda i: (i, 0, 0)),  # one image
                pl.BlockSpec((hid, 9 * c), lambda i: (0, 0)),           # W1 (resident)
                pl.BlockSpec((hid, 1), lambda i: (0, 0)),               # b1
                pl.BlockSpec((ncls, hid), lambda i: (0, 0)),            # W2
                pl.BlockSpec((ncls, 1), lambda i: (0, 0)),              # b2
            ],
            out_specs=pl.BlockSpec((None, ncls, m_pad), lambda i: (i, 0, 0)),
            scratch_shapes=[pltpu.VMEM((9 * c, m_pad), jnp.bfloat16)],
        ),
        compiler_params=pltpu.CompilerParams(
            dimension_semantics=("parallel",),        # both v7x TCs at N>=2
            vmem_limit_bytes=32 * 1024 * 1024,        # explicit (v5e default 16 MiB)
        ),
        cost_estimate=pl.CostEstimate(
            flops=flops, transcendentals=0, bytes_accessed=bytes_accessed),
    )(xf, w1f, b1, w2, b2)


# -----------------------------------------------------------------------------
# The wrapped "network": returns an output dictionary, deeplab-style.
# -----------------------------------------------------------------------------
def network_forward(x_nchw, params):
    n, c, h, w = x_nchw.shape
    wp = w + 2
    m_valid = h * wp                      # flat output bases we actually need
    m_pad = _round_up(m_valid, 128)       # lane-dense output tile
    need = m_pad + 2 * wp + 2             # widest in-kernel tap slice
    rows = max(-(-need // wp), h + 2)     # padded rows (bottom rows = tail pad)

    # Single cast + single pad (the bottom zero rows double as the flat-axis
    # tail padding); reshape is free.  1x HBM traffic into the kernel.
    # TODO(synk): fuse the pad/cast into the pallas_call operand via
    # CompilerParams(allow_input_fusion=...) or mask band edges in-kernel.
    xq = x_nchw.astype(jnp.bfloat16)
    xp = jnp.pad(xq, ((0, 0), (0, 0), (1, rows - h - 1), (1, 1)))   # (N,C,rows,Wp)
    xf = xp.reshape(n, c, rows * wp)                                # (N,C,L)

    # Tap-flattened transposed W1: w1f[o, (ky*3+kx)*C + ci] = conv1.weight[o, ci, ky, kx].
    hid = params["w1"].shape[0]
    w1f = jnp.transpose(params["w1"], (0, 2, 3, 1)).reshape(hid, 9 * c)
    w1f = w1f.astype(jnp.bfloat16)
    w2 = params["w2"].astype(jnp.bfloat16)
    b1, b2 = params["b1"], params["b2"]
    ncls = w2.shape[0]

    y = _fused_head(xf, w1f, b1, w2, b2, wp=wp, m_pad=m_pad)   # (N, NCLS, M_pad)
    # Output base b = row*Wp + col, valid for col < W -> slice/reshape is NCHW.
    y = y[:, :, :m_valid].reshape(n, ncls, h, wp)[:, :, :, :w]
    return {"out": y}


# -----------------------------------------------------------------------------
# SingleOutNet forward semantics.
# -----------------------------------------------------------------------------
def single_out_net_forward(x, params, *, training=False):
    """Eval/no-grad mode returns only the 'out' entry (PyTorch wrapper semantics)."""
    # TODO(synk): torch.is_grad_enabled() has no JAX analogue; `training` stands
    # in for (self.training or torch.is_grad_enabled()).
    # TODO(synk): the wrapped deeplab's optional 'aux' head is not modeled.
    outputs = network_forward(x, params)
    if training:
        return outputs
    return outputs["out"]


# -----------------------------------------------------------------------------
# Deterministic parameter init (torch-like layouts).
#   w1[o, c, ky, kx] <-> torch conv1.weight ;  w2[p, o] <-> conv2.weight[p, o, 0, 0]
# -----------------------------------------------------------------------------
def init_params(key, c_in, hidden, n_classes):
    k1, k2, k3, k4 = jax.random.split(key, 4)
    w1 = jax.random.normal(k1, (hidden, c_in, 3, 3), jnp.float32) * 0.1
    b1 = jax.random.normal(k2, (hidden, 1), jnp.float32) * 0.01
    w2 = jax.random.normal(k3, (n_classes, hidden), jnp.float32) * 0.1
    b2 = jax.random.normal(k4, (n_classes, 1), jnp.float32) * 0.01
    return {"w1": w1, "b1": b1, "w2": w2, "b2": b2}


if __name__ == "__main__":
    key = jax.random.PRNGKey(0)
    kx, kp = jax.random.split(key)

    N, C, H, W = 2, 4, 16, 16
    HIDDEN, N_CLASSES = 32, 8

    x = jax.random.normal(kx, (N, C, H, W), jnp.float32)      # NCHW input
    params = init_params(kp, C, HIDDEN, N_CLASSES)

    out = single_out_net_forward(x, params, training=False)
    out = jax.block_until_ready(out)
    assert out.shape == (N, N_CLASSES, H, W), out.shape

    # Pure-JAX reference mirroring the kernel's bf16 quantization points with
    # exact f32 accumulation.
    q = lambda a: a.astype(jnp.bfloat16).astype(jnp.float32)
    xb, w1b, w2b = q(x), q(params["w1"]), q(params["w2"])
    xpad = jnp.pad(xb, ((0, 0), (0, 0), (1, 1), (1, 1)))
    patches = jnp.stack([xpad[:, :, ky:ky + H, kx:kx + W]
                         for ky in range(3) for kx in range(3)], axis=1)  # (N,9,C,H,W)
    w1k = jnp.transpose(w1b, (2, 3, 0, 1)).reshape(9, HIDDEN, C)          # [k, o, ci]
    hid = jnp.einsum("nkchw,koc->nohw", patches, w1k,
                     precision=jax.lax.Precision.HIGHEST)
    hid = jnp.maximum(hid + params["b1"].reshape(1, HIDDEN, 1, 1), 0.0)
    ref = jnp.einsum("nohw,po->nphw", q(hid), w2b,
                     precision=jax.lax.Precision.HIGHEST)
    ref = ref + params["b2"].reshape(1, N_CLASSES, 1, 1)

    out_f32 = out.astype(jnp.float32)
    assert jnp.allclose(out_f32, ref, atol=2e-2, rtol=2e-2), \
        float(jnp.max(jnp.abs(out_f32 - ref)))

    print("KERNEL_OK")
</pallas_src>

<mosaic_0001>
module attributes {stable_mosaic.version = 11 : i64} {
  func.func @_head_kernel(%arg0: i32, %arg1: memref<1x4x432xbf16, #tpu.memory_space<vmem>>, %arg2: memref<32x36xbf16, #tpu.memory_space<vmem>>, %arg3: memref<32x1xf32, #tpu.memory_space<vmem>>, %arg4: memref<8x32xbf16, #tpu.memory_space<vmem>>, %arg5: memref<8x1xf32, #tpu.memory_space<vmem>>, %arg6: memref<1x8x384xbf16, #tpu.memory_space<vmem>>, %arg7: memref<36x384xbf16, #tpu.memory_space<vmem>>) attributes {dimension_semantics = [#tpu.dimension_semantics<parallel>], iteration_bounds = array<i64: 2>, scalar_prefetch = 0 : i64, scratch_operands = 1 : i64, tpu.core_type = #tpu.core_type<tc>, window_params = [{transform_indices = @transform_0, window_bounds = array<i64: 1, 4, 432>}, {pipeline_mode = #tpu.pipeline_mode<synchronous>, transform_indices = @transform_1, window_bounds = array<i64: 32, 36>}, {pipeline_mode = #tpu.pipeline_mode<synchronous>, transform_indices = @transform_2, window_bounds = array<i64: 32, 1>}, {pipeline_mode = #tpu.pipeline_mode<synchronous>, transform_indices = @transform_3, window_bounds = array<i64: 8, 32>}, {pipeline_mode = #tpu.pipeline_mode<synchronous>, transform_indices = @transform_4, window_bounds = array<i64: 8, 1>}, {transform_indices = @transform_5, window_bounds = array<i64: 1, 8, 384>}]} {
    %c0 = arith.constant 0 : index
    %c0_0 = arith.constant 0 : index
    %c0_1 = arith.constant 0 : index
    %0 = vector.load %arg1[%c0, %c0_0, %c0_1] : memref<1x4x432xbf16, #tpu.memory_space<vmem>>, vector<1x4x384xbf16>
    %1 = vector.shape_cast %0 : vector<1x4x384xbf16> to vector<4x384xbf16>
    %c0_2 = arith.constant 0 : index
    %c0_3 = arith.constant 0 : index
    %2 = vector.load %arg7[%c0_2, %c0_3] : memref<36x384xbf16, #tpu.memory_space<vmem>>, vector<4x384xbf16>
    tpu.vector_store %arg7[%c0_2, %c0_3], %1 {strides = array<i32>} : memref<36x384xbf16, #tpu.memory_space<vmem>>, vector<4x384xbf16>,
    %c0_4 = arith.constant 0 : index
    %c0_5 = arith.constant 0 : index
    %c1 = arith.constant 1 : index
    %3 = vector.load %arg1[%c0_4, %c0_5, %c1] : memref<1x4x432xbf16, #tpu.memory_space<vmem>>, vector<1x4x384xbf16>
    %4 = vector.shape_cast %3 : vector<1x4x384xbf16> to vector<4x384xbf16>
    %c4 = arith.constant 4 : index
    %c0_6 = arith.constant 0 : index
    %5 = vector.load %arg7[%c4, %c0_6] : memref<36x384xbf16, #tpu.memory_space<vmem>>, vector<4x384xbf16>
    tpu.vector_store %arg7[%c4, %c0_6], %4 {strides = array<i32>} : memref<36x384xbf16, #tpu.memory_space<vmem>>, vector<4x384xbf16>,
    %c0_7 = arith.constant 0 : index
    %c0_8 = arith.constant 0 : index
    %c2 = arith.constant 2 : index
    %6 = vector.load %arg1[%c0_7, %c0_8, %c2] : memref<1x4x432xbf16, #tpu.memory_space<vmem>>, vector<1x4x384xbf16>
    %7 = vector.shape_cast %6 : vector<1x4x384xbf16> to vector<4x384xbf16>
    %c8 = arith.constant 8 : index
    %c0_9 = arith.constant 0 : index
    %8 = vector.load %arg7[%c8, %c0_9] : memref<36x384xbf16, #tpu.memory_space<vmem>>, vector<4x384xbf16>
    tpu.vector_store %arg7[%c8, %c0_9], %7 {strides = array<i32>} : memref<36x384xbf16, #tpu.memory_space<vmem>>, vector<4x384xbf16>,
    %c0_10 = arith.constant 0 : index
    %c0_11 = arith.constant 0 : index
    %c18 = arith.constant 18 : index
    %9 = vector.load %arg1[%c0_10, %c0_11, %c18] : memref<1x4x432xbf16, #tpu.memory_space<vmem>>, vector<1x4x384xbf16>
    %10 = vector.shape_cast %9 : vector<1x4x384xbf16> to vector<4x384xbf16>
    %c12 = arith.constant 12 : index
    %c0_12 = arith.constant 0 : index
    %11 = vector.load %arg7[%c12, %c0_12] : memref<36x384xbf16, #tpu.memory_space<vmem>>, vector<4x384xbf16>
    tpu.vector_store %arg7[%c12, %c0_12], %10 {strides = array<i32>} : memref<36x384xbf16, #tpu.memory_space<vmem>>, vector<4x384xbf16>,
    %c0_13 = arith.constant 0 : index
    %c0_14 = arith.constant 0 : index
    %c19 = arith.constant 19 : index
    %12 = vector.load %arg1[%c0_13, %c0_14, %c19] : memref<1x4x432xbf16, #tpu.memory_space<vmem>>, vector<1x4x384xbf16>
    %13 = vector.shape_cast %12 : vector<1x4x384xbf16> to vector<4x384xbf16>
    %c16 = arith.constant 16 : index
    %c0_15 = arith.constant 0 : index
    %14 = vector.load %arg7[%c16, %c0_15] : memref<36x384xbf16, #tpu.memory_space<vmem>>, vector<4x384xbf16>
    tpu.vector_store %arg7[%c16, %c0_15], %13 {strides = array<i32>} : memref<36x384xbf16, #tpu.memory_space<vmem>>, vector<4x384xbf16>,
    %c0_16 = arith.constant 0 : index
    %c0_17 = arith.constant 0 : index
    %c20 = arith.constant 20 : index
    %15 = vector.load %arg1[%c0_16, %c0_17, %c20] : memref<1x4x432xbf16, #tpu.memory_space<vmem>>, vector<1x4x384xbf16>
    %16 = vector.shape_cast %15 : vector<1x4x384xbf16> to vector<4x384xbf16>
    %c20_18 = arith.constant 20 : index
    %c0_19 = arith.constant 0 : index
    %17 = vector.load %arg7[%c20_18, %c0_19] : memref<36x384xbf16, #tpu.memory_space<vmem>>, vector<4x384xbf16>
    tpu.vector_store %arg7[%c20_18, %c0_19], %16 {strides = array<i32>} : memref<36x384xbf16, #tpu.memory_space<vmem>>, vector<4x384xbf16>,
    %c0_20 = arith.constant 0 : index
    %c0_21 = arith.constant 0 : index
    %c36 = arith.constant 36 : index
    %18 = vector.load %arg1[%c0_20, %c0_21, %c36] : memref<1x4x432xbf16, #tpu.memory_space<vmem>>, vector<1x4x384xbf16>
    %19 = vector.shape_cast %18 : vector<1x4x384xbf16> to vector<4x384xbf16>
    %c24 = arith.constant 24 : index
    %c0_22 = arith.constant 0 : index
    %20 = vector.load %arg7[%c24, %c0_22] : memref<36x384xbf16, #tpu.memory_space<vmem>>, vector<4x384xbf16>
    tpu.vector_store %arg7[%c24, %c0_22], %19 {strides = array<i32>} : memref<36x384xbf16, #tpu.memory_space<vmem>>, vector<4x384xbf16>,
    %c0_23 = arith.constant 0 : index
    %c0_24 = arith.constant 0 : index
    %c37 = arith.constant 37 : index
    %21 = vector.load %arg1[%c0_23, %c0_24, %c37] : memref<1x4x432xbf16, #tpu.memory_space<vmem>>, vector<1x4x384xbf16>
    %22 = vector.shape_cast %21 : vector<1x4x384xbf16> to vector<4x384xbf16>
    %c28 = arith.constant 28 : index
    %c0_25 = arith.constant 0 : index
    %23 = vector.load %arg7[%c28, %c0_25] : memref<36x384xbf16, #tpu.memory_space<vmem>>, vector<4x384xbf16>
    tpu.vector_store %arg7[%c28, %c0_25], %22 {strides = array<i32>} : memref<36x384xbf16, #tpu.memory_space<vmem>>, vector<4x384xbf16>,
    %c0_26 = arith.constant 0 : index
    %c0_27 = arith.constant 0 : index
    %c38 = arith.constant 38 : index
    %24 = vector.load %arg1[%c0_26, %c0_27, %c38] : memref<1x4x432xbf16, #tpu.memory_space<vmem>>, vector<1x4x384xbf16>
    %25 = vector.shape_cast %24 : vector<1x4x384xbf16> to vector<4x384xbf16>
    %c32 = arith.constant 32 : index
    %c0_28 = arith.constant 0 : index
    %26 = vector.load %arg7[%c32, %c0_28] : memref<36x384xbf16, #tpu.memory_space<vmem>>, vector<4x384xbf16>
    tpu.vector_store %arg7[%c32, %c0_28], %25 {strides = array<i32>} : memref<36x384xbf16, #tpu.memory_space<vmem>>, vector<4x384xbf16>,
    %c0_29 = arith.constant 0 : index
    %c0_30 = arith.constant 0 : index
    %27 = vector.load %arg2[%c0_29, %c0_30] : memref<32x36xbf16, #tpu.memory_space<vmem>>, vector<32x36xbf16>
    %c0_31 = arith.constant 0 : index
    %c0_32 = arith.constant 0 : index
    %28 = vector.load %arg7[%c0_31, %c0_32] : memref<36x384xbf16, #tpu.memory_space<vmem>>, vector<36x384xbf16>
    %cst = arith.constant dense<0.000000e+00> : vector<32x384xf32>
    %29 = tpu.matmul %27, %28, %cst {dimension_numbers = #tpu.dot_dimension_numbers<[1], [0], [0], [1], [0, 0, 1, 1], [], []>} : vector<32x36xbf16>, vector<36x384xbf16>, vector<32x384xf32> -> vector<32x384xf32>
    %c0_33 = arith.constant 0 : index
    %c0_34 = arith.constant 0 : index
    %30 = vector.load %arg3[%c0_33, %c0_34] : memref<32x1xf32, #tpu.memory_space<vmem>>, vector<32x1xf32>
    %31 = vector.broadcast %30 : vector<32x1xf32> to vector<32x384xf32>
    %32 = arith.addf %29, %31 : vector<32x384xf32>
    %cst_35 = arith.constant 0.000000e+00 : f32
    %33 = vector.broadcast %cst_35 : f32 to vector<32x384xf32>
    %34 = arith.maximumf %32, %33 : vector<32x384xf32>
    %c0_36 = arith.constant 0 : index
    %c0_37 = arith.constant 0 : index
    %35 = vector.load %arg4[%c0_36, %c0_37] : memref<8x32xbf16, #tpu.memory_space<vmem>>, vector<8x32xbf16>
    %36 = arith.truncf %34 : vector<32x384xf32> to vector<32x384xbf16>
    %cst_38 = arith.constant dense<0.000000e+00> : vector<8x384xf32>
    %37 = tpu.matmul %35, %36, %cst_38 {dimension_numbers = #tpu.dot_dimension_numbers<[1], [0], [0], [1], [0, 0, 1, 1], [], []>} : vector<8x32xbf16>, vector<32x384xbf16>, vector<8x384xf32> -> vector<8x384xf32>
    %c0_39 = arith.constant 0 : index
    %c0_40 = arith.constant 0 : index
    %38 = vector.load %arg5[%c0_39, %c0_40] : memref<8x1xf32, #tpu.memory_space<vmem>>, vector<8x1xf32>
    %39 = vector.broadcast %38 : vector<8x1xf32> to vector<8x384xf32>
    %40 = arith.addf %37, %39 : vector<8x384xf32>
    %41 = arith.truncf %40 : vector<8x384xf32> to vector<8x384xbf16>
    %c0_41 = arith.constant 0 : index
    %c0_42 = arith.constant 0 : index
    %c0_43 = arith.constant 0 : index
    %42 = vector.load %arg6[%c0_41, %c0_42, %c0_43] : memref<1x8x384xbf16, #tpu.memory_space<vmem>>, vector<1x8x384xbf16>
    %43 = vector.shape_cast %42 : vector<1x8x384xbf16> to vector<8x384xbf16>
    %44 = vector.shape_cast %41 : vector<8x384xbf16> to vector<1x8x384xbf16>
    tpu.vector_store %arg6[%c0_41, %c0_42, %c0_43], %44 {strides = array<i32>} : memref<1x8x384xbf16, #tpu.memory_space<vmem>>, vector<1x8x384xbf16>,
    return
  }
  func.func @transform_0(%arg0: i32) -> (i32, i32, i32) {
    %c0_i32 = arith.constant 0 : i32
    %c0_i32_0 = arith.constant 0 : i32
    %c0_i32_1 = arith.constant 0 : i32
    return %arg0, %c0_i32, %c0_i32_0 : i32, i32, i32
  }
  func.func @transform_1(%arg0: i32) -> (i32, i32) {
    %c0_i32 = arith.constant 0 : i32
    %c0_i32_0 = arith.constant 0 : i32
    %c0_i32_1 = arith.constant 0 : i32
    return %c0_i32, %c0_i32_0 : i32, i32
  }
  func.func @transform_2(%arg0: i32) -> (i32, i32) {
    %c0_i32 = arith.constant 0 : i32
    %c0_i32_0 = arith.constant 0 : i32
    %c0_i32_1 = arith.constant 0 : i32
    return %c0_i32, %c0_i32_0 : i32, i32
  }
  func.func @transform_3(%arg0: i32) -> (i32, i32) {
    %c0_i32 = arith.constant 0 : i32
    %c0_i32_0 = arith.constant 0 : i32
    %c0_i32_1 = arith.constant 0 : i32
    return %c0_i32, %c0_i32_0 : i32, i32
  }
  func.func @transform_4(%arg0: i32) -> (i32, i32) {
    %c0_i32 = arith.constant 0 : i32
    %c0_i32_0 = arith.constant 0 : i32
    %c0_i32_1 = arith.constant 0 : i32
    return %c0_i32, %c0_i32_0 : i32, i32
  }
  func.func @transform_5(%arg0: i32) -> (i32, i32, i32) {
    %c0_i32 = arith.constant 0 : i32
    %c0_i32_0 = arith.constant 0 : i32
    %c0_i32_1 = arith.constant 0 : i32
    return %arg0, %c0_i32, %c0_i32_0 : i32, i32, i32
  }
}

</mosaic_0001>

<llo_original>
// kernel: tpu_custom_call.1
$region0: #{tpu_custom_call.1}
  #allocation0 [shape = 'u32[]', space=smem, size = 0x4, offset = 0x4, fixed_abs, tag = 'smem constant byte address 0x4 - core index']
  #allocation1 [shape = 'u32[144,128]{1,0:T(1,128)}', space=vmem, size = 0x12000, scoped, tag = 'internal scratch']
  #allocation2 [shape = 'bf16[36,384]{1,0:T(8,128)(2,1)}', space=vmem, size = 0x7800, scoped, tag = 'scratch operand']
  %s0 = inlined_call_operand.vmem [shape: bf16[2,4,432], index: 0, kind: input, shape index: {}]
  %s1 = inlined_call_operand.vmem [shape: bf16[32,36], index: 1, kind: input, shape index: {}]
  %s2 = inlined_call_operand.vmem [shape: f32[32,1], index: 2, kind: input, shape index: {}]
  %s3 = inlined_call_operand.vmem [shape: bf16[8,32], index: 3, kind: input, shape index: {}]
  %s4 = inlined_call_operand.vmem [shape: f32[8,1], index: 4, kind: input, shape index: {}]
  %s5 = inlined_call_operand.hbm [shape: bf16[2,8,384], index: 5, kind: output, shape index: {}]
  %s6 = sld [smem:[#allocation0]]
  $region53: #{tpu_custom_call.1} parent=0
    _
  %s8 = ssub.s32 1, %s6
  %s9 = scalar_select 0, %s8, %s6
  $region1: #{tpu_custom_call.1} parent=0
    #allocation3 [shape = 'u8[12288]{0}', space=vmem, size = 0x3000, scoped, tag = 'output window, operand 0']
    #allocation4 [shape = 's32[2]{0}', space=sflag, size = 0x8, scoped, tag = 'scoped memory for tpu_custom_call.1']
    %10 = vsyncpa [#allocation4], 0
    %s11 = scalar_lea.sflag [#allocation4], 1
    %12 = vsyncpa %s11, 0
    loop: start=0, step=1, limit=4
    $region2: #{tpu_custom_call.1} parent=1 // loop_pre_header
      _
    $region3: #{tpu_custom_call.1} parent=1 // loop_header
      %s14 = sphi 0, %s18
      %p15 = scmp.ge.s32.totalorder %s14, 4
      %s24 = sphi 0, %s26
      %s27 = sphi 0, %s24
      %s28 = sphi 0, %s27
      %s44 = sphi 0, %s28
      %s48 = sphi 0, %s48
      %s50 = sphi 0, %s48
      %s51 = sphi 0, %s50
      %s65 = sphi 0, %s51
      %s69 = sphi 0, %s69
      %s71 = sphi 0, %s69
      %s72 = sphi 0, %s71
      %s86 = sphi 0, %s72
      %s90 = sphi 0, %s90
      %s92 = sphi 0, %s90
      %s93 = sphi 0, %s92
      %s107 = sphi 0, %s93
      %s111 = sphi 0, %s111
      %s113 = sphi 0, %s111
      %s114 = sphi 0, %s113
      %s128 = sphi 0, %s114
      %s134 = sphi 0, %s136
      %s137 = sphi 0, %s134
      %s138 = sphi 0, %s137
      %s154 = sphi 0, %s138
    $region4: #{tpu_custom_call.1} parent=1 // loop_header_branch
      %17 = sbr.rel (%p15) target = $region8
    $region5: #{tpu_custom_call.1} parent=1 // loop_body
      %s19 = ssub.s32 %s14, 1
      %s20 = ssub.s32 %s14, 2
      %s21 = sadd.s32 %s14, 1
      %s22 = ssub.s32 %s14, %s21
      %p23 = scmp.eq.s32.totalorder %s22, 0
      %s25 = sadd.s32 %s24, 1
      %s26 = scalar_select %p23, %s24, %s25
      %p29 = pneg %p23
      %p30 = scmp.eq.s32.totalorder %s14, 1
      %p31 = por %p29, %p30
      %p32 = scmp.ne.s32.totalorder %s24, %s27
      %p33 = scmp.eq.s32.totalorder %s14, 0
      %p34 = por %p32, %p33
      %p35 = scmp.ne.s32.totalorder %s24, %s27
      %p36 = scmp.eq.s32.totalorder %s19, 1
      %p37 = por %p35, %p36
      %p38 = scmp.ne.s32.totalorder %s27, %s28
      %p39 = scmp.eq.s32.totalorder %s19, 0
      %p40 = por %p38, %p39
      %p41 = scmp.ne.s32.totalorder %s27, %s28
      %p42 = scmp.eq.s32.totalorder %s20, 1
      %p43 = por %p41, %p42
      %p45 = scmp.ne.s32.totalorder %s28, %s44
      %p46 = scmp.eq.s32.totalorder %s20, 0
      %p47 = por %p45, %p46
      %s49 = sadd.s32 %s48, 1
      %p52 = scmp.eq.s32.totalorder %s14, 1
      %p53 = scmp.ne.s32.totalorder %s48, %s50
      %p54 = scmp.eq.s32.totalorder %s14, 0
      %p55 = por %p53, %p54
      %p56 = scmp.ne.s32.totalorder %s48, %s50
      %p57 = scmp.eq.s32.totalorder %s19, 1
      %p58 = por %p56, %p57
      %p59 = scmp.ne.s32.totalorder %s50, %s51
      %p60 = scmp.eq.s32.totalorder %s19, 0
      %p61 = por %p59, %p60
      %p62 = scmp.ne.s32.totalorder %s50, %s51
      %p63 = scmp.eq.s32.totalorder %s20, 1
      %p64 = por %p62, %p63
      %p66 = scmp.ne.s32.totalorder %s51, %s65
      %p67 = scmp.eq.s32.totalorder %s20, 0
      %p68 = por %p66, %p67
      %s70 = sadd.s32 %s69, 1
      %p73 = scmp.eq.s32.totalorder %s14, 1
      %p74 = scmp.ne.s32.totalorder %s69, %s71
      %p75 = scmp.eq.s32.totalorder %s14, 0
      %p76 = por %p74, %p75
      %p77 = scmp.ne.s32.totalorder %s69, %s71
      %p78 = scmp.eq.s32.totalorder %s19, 1
      %p79 = por %p77, %p78
      %p80 = scmp.ne.s32.totalorder %s71, %s72
      %p81 = scmp.eq.s32.totalorder %s19, 0
      %p82 = por %p80, %p81
      %p83 = scmp.ne.s32.totalorder %s71, %s72
      %p84 = scmp.eq.s32.totalorder %s20, 1
      %p85 = por %p83, %p84
      %p87 = scmp.ne.s32.totalorder %s72, %s86
      %p88 = scmp.eq.s32.totalorder %s20, 0
      %p89 = por %p87, %p88
      %s91 = sadd.s32 %s90, 1
      %p94 = scmp.eq.s32.totalorder %s14, 1
      %p95 = scmp.ne.s32.totalorder %s90, %s92
      %p96 = scmp.eq.s32.totalorder %s14, 0
      %p97 = por %p95, %p96
      %p98 = scmp.ne.s32.totalorder %s90, %s92
      %p99 = scmp.eq.s32.totalorder %s19, 1
      %p100 = por %p98, %p99
      %p101 = scmp.ne.s32.totalorder %s92, %s93
      %p102 = scmp.eq.s32.totalorder %s19, 0
      %p103 = por %p101, %p102
      %p104 = scmp.ne.s32.totalorder %s92, %s93
      %p105 = scmp.eq.s32.totalorder %s20, 1
      %p106 = por %p104, %p105
      %p108 = scmp.ne.s32.totalorder %s93, %s107
      %p109 = scmp.eq.s32.totalorder %s20, 0
      %p110 = por %p108, %p109
      %s112 = sadd.s32 %s111, 1
      %p115 = scmp.eq.s32.totalorder %s14, 1
      %p116 = scmp.ne.s32.totalorder %s111, %s113
      %p117 = scmp.eq.s32.totalorder %s14, 0
      %p118 = por %p116, %p117
      %p119 = scmp.ne.s32.totalorder %s111, %s113
      %p120 = scmp.eq.s32.totalorder %s19, 1
      %p121 = por %p119, %p120
      %p122 = scmp.ne.s32.totalorder %s113, %s114
      %p123 = scmp.eq.s32.totalorder %s19, 0
      %p124 = por %p122, %p123
      %p125 = scmp.ne.s32.totalorder %s113, %s114
      %p126 = scmp.eq.s32.totalorder %s20, 1
      %p127 = por %p125, %p126
      %p129 = scmp.ne.s32.totalorder %s114, %s128
      %p130 = scmp.eq.s32.totalorder %s20, 0
      %p131 = por %p129, %p130
      %s132 = ssub.s32 %s14, %s21
      %p133 = scmp.eq.s32.totalorder %s132, 0
      %s135 = sadd.s32 %s134, 1
      %s136 = scalar_select %p133, %s134, %s135
      %p139 = pneg %p133
      %p140 = scmp.eq.s32.totalorder %s14, 1
      %p141 = por %p139, %p140
      %p142 = scmp.ne.s32.totalorder %s134, %s137
      %p143 = scmp.eq.s32.totalorder %s14, 0
      %p144 = por %p142, %p143
      %p145 = scmp.ne.s32.totalorder %s134, %s137
      %p146 = scmp.eq.s32.totalorder %s19, 1
      %p147 = por %p145, %p146
      %p148 = scmp.ne.s32.totalorder %s137, %s138
      %p149 = scmp.eq.s32.totalorder %s19, 0
      %p150 = por %p148, %p149
      %p151 = scmp.ne.s32.totalorder %s137, %s138
      %p152 = scmp.eq.s32.totalorder %s20, 1
      %p153 = por %p151, %p152
      %p155 = scmp.ne.s32.totalorder %s138, %s154
      %p156 = scmp.eq.s32.totalorder %s20, 0
      %p157 = por %p155, %p156
      %p158 = scmp.le.s32.totalorder 1, %s14
      %p159 = scmp.lt.s32.totalorder %s14, 3
      %p160 = pnand %p158, %p159
      %p161 = pneg %p160
      // Predicated region
      $region9: #{tpu_custom_call.1} parent=5 // pred_check
        _
      $region10: #{tpu_custom_call.1} parent=5 // pred_check_branch
        %163 = sbr.rel (%p160) target = $region12
      $region11: #{tpu_custom_call.1} parent=5 // pred_region
        %s164 = ssub.s32 %s14, 1
        // Predicated region
        $region13: #{tpu_custom_call.1} parent=11 // pred_check
          %p165 = pneg %p61
        $region14: #{tpu_custom_call.1} parent=11 // pred_check_branch
          %167 = sbr.rel (%p165) target = $region16
        $region15: #{tpu_custom_call.1} parent=11 // pred_region
          _
        $region16: #{tpu_custom_call.1} parent=11 // pred_fallthru
          _
        // Predicated region
        $region17: #{tpu_custom_call.1} parent=11 // pred_check
          %p168 = pneg %p82
        $region18: #{tpu_custom_call.1} parent=11 // pred_check_branch
          %170 = sbr.rel (%p168) target = $region20
        $region19: #{tpu_custom_call.1} parent=11 // pred_region
          _
        $region20: #{tpu_custom_call.1} parent=11 // pred_fallthru
          _
        // Predicated region
        $region21: #{tpu_custom_call.1} parent=11 // pred_check
          %p171 = pneg %p103
        $region22: #{tpu_custom_call.1} parent=11 // pred_check_branch
          %173 = sbr.rel (%p171) target = $region24
        $region23: #{tpu_custom_call.1} parent=11 // pred_region
          _
        $region24: #{tpu_custom_call.1} parent=11 // pred_fallthru
          _
        // Predicated region
        $region25: #{tpu_custom_call.1} parent=11 // pred_check
          %p174 = pneg %p124
        $region26: #{tpu_custom_call.1} parent=11 // pred_check_branch
          %176 = sbr.rel (%p174) target = $region28
        $region27: #{tpu_custom_call.1} parent=11 // pred_region
          _
        $region28: #{tpu_custom_call.1} parent=11 // pred_fallthru
          _
      $region12: #{tpu_custom_call.1} parent=5 // pred_fallthru
        _
      %p177 = scmp.lt.s32.totalorder %s14, 2
      // Predicated region
      $region29: #{tpu_custom_call.1} parent=5 // pred_check
        %p178 = pneg %p177
      $region30: #{tpu_custom_call.1} parent=5 // pred_check_branch
        %180 = sbr.rel (%p178) target = $region32
      $region31: #{tpu_custom_call.1} parent=5 // pred_region
        // Predicated region
        $region33: #{tpu_custom_call.1} parent=31 // pred_check
          %p181 = pneg %p34
        $region34: #{tpu_custom_call.1} parent=31 // pred_check_branch
          %183 = sbr.rel (%p181) target = $region36
        $region35: #{tpu_custom_call.1} parent=31 // pred_region
          %p184 = scmp.lt.s32.totalorder %s14, 1
          %s185 = scalar_select %p184, %s14, 1
          %s186 = smul.addr %s185, 4
          %s187 = smul.addr %s186, 2
          %s188 = scalar_lea.vmem %s0, %s187
        $region36: #{tpu_custom_call.1} parent=31 // pred_fallthru
          _
      $region32: #{tpu_custom_call.1} parent=5 // pred_fallthru
        _
      %p189 = scmp.le.s32.totalorder 1, %s14
      %p190 = scmp.lt.s32.totalorder %s14, 3
      %p191 = pnand %p189, %p190
      %p192 = pneg %p191
      // Predicated region
      $region37: #{tpu_custom_call.1} parent=5 // pred_check
        _
      $region38: #{tpu_custom_call.1} parent=5 // pred_check_branch
        %194 = sbr.rel (%p191) target = $region40
      $region39: #{tpu_custom_call.1} parent=5 // pred_region
        %s195 = ssub.s32 %s14, 1
        %p196 = scmp.lt.s32.totalorder %s19, 1
        %s197 = scalar_select %p196, %s19, 1
        %s198 = smul.addr %s197, 4
        %s199 = smul.addr %s198, 2
        %s200 = scalar_lea.vmem %s0, %s199
        %p201 = pneg %p40
        %p202 = pneg %p37
        %p203 = pneg %p61
        %p204 = pneg %p58
        %p205 = pneg %p82
        %p206 = pneg %p79
        %p207 = pneg %p103
        %p208 = pneg %p100
        %p209 = pneg %p124
        %p210 = pneg %p121
        %p211 = pneg %p150
        %p212 = pneg %p147
        %s213 = sand.u32 %s137, 1
        %s214 = scalar_lea.sflag [#allocation4], %s213
        %s215 = sand.u32 %s137, 1
        %s216 = smul.addr %s215, 12
        %s217 = scalar_lea.vmem [#allocation3], %s216
        %p218 = scmp.lt.s32.totalorder %s19, 1
        %s219 = scalar_select %p218, %s19, 1
        %s220 = smul.addr %s219, 4
        %s221 = smul.addr %s220, 2
        %s222 = scalar_lea.vmem %s0, %s221
        %v224 = vld [vmem:[%s222] sm:$0x3f]
        %v226 = vcombine.high %v224, %v224
        %v228 = vunpack.c.l.s4 1983009808
        %v229 = vunpack.c.0.s8 %v228
        %v230 = vlaneseq
        %v231 = vshrl.u32 %v230, 7
        %v232 = vsub.s32 %v229, %v231
        %v233 = vrot.slane %v224, %v232
        %v235 = vunpack.c.l.s4 1983009808
        %v236 = vunpack.c.0.s8 %v235
        %v237 = vlaneseq
        %v238 = vshrl.u32 %v237, 7
        %v239 = vsub.s32 %v236, %v238
        %v240 = vrot.slane %v226, %v239
        %243 = vst [vmem:[#allocation2] sm:$0x33] %v233
        %244 = vst [vmem:[#allocation2 + $0x8] sm:$0x3] %v240
        %v245 = vld [vmem:[%s222] sm:$0xff]
        %v247 = vcombine.low %v245, %v245
        %v249 = vunpack.c.l.s4 1983009808
        %v250 = vunpack.c.0.s8 %v249
        %v251 = vlaneseq
        %v252 = vshrl.u32 %v251, 7
        %v253 = vsub.s32 %v250, %v252
        %v254 = vrot.slane %v247, %v253
        %v256 = vunpack.c.l.s4 1983009808
        %v257 = vunpack.c.0.s8 %v256
        %v258 = vlaneseq
        %v259 = vshrl.u32 %v258, 7
        %v260 = vsub.s32 %v257, %v259
        %v261 = vrot.slane %v245, %v260
        %262 = vrot.lane.b32.xlu0 %v254, 127
        %v263 = vpop.permute.xlu0 %262
        %264 = vrot.lane.b32.xlu0 %v261, 127
        %v265 = vpop.permute.xlu0 %264
        %v266 = vrot.slane %v263, 4
        %v267 = vrot.slane %v265, 4
        %vm268 = vcmask 1043456
        %v269 = vsel %vm268, %v266, %v267
        %vm270 = vcmask 1039360
        %v271 = vsel %vm270, %v263, %v269
        %v272 = vsel %vm270, %v265, %v267
        %275 = vst [vmem:[#allocation2] sm:$0xcc] %v271
        %276 = vst [vmem:[#allocation2 + $0x8] sm:$0xc] %v272
        %v277 = vld [vmem:[%s222] sm:$0xff]
        %v279 = vcombine.high %v277, %v277
        %v281 = vunpack.c.l.s4 1983009808
        %v282 = vunpack.c.0.s8 %v281
        %v283 = vlaneseq
        %v284 = vshrl.u32 %v283, 7
        %v285 = vsub.s32 %v282, %v284
        %v286 = vrot.slane %v277, %v285
        %v288 = vunpack.c.l.s4 1983009808
        %v289 = vunpack.c.0.s8 %v288
        %v290 = vlaneseq
        %v291 = vshrl.u32 %v290, 7
        %v292 = vsub.s32 %v289, %v291
        %v293 = vrot.slane %v279, %v292
        %294 = vrot.lane.b32.xlu0 %v286, 126
        %v295 = vpop.permute.xlu0 %294
        %296 = vrot.lane.b32.xlu0 %v293, 126
        %v297 = vpop.permute.xlu0 %296
        %v298 = vrot.slane %v295, 4
        %v299 = vrot.slane %v297, 4
        %v300 = vsel %vm268, %v298, %v299
        %vm301 = vcmask 1031168
        %v302 = vsel %vm301, %v295, %v300
        %v303 = vsel %vm301, %v297, %v299
        %306 = vst [vmem:[#allocation2 + $0xc] sm:$0x33] %v302
        %307 = vst [vmem:[#allocation2 + $0x14] sm:$0x3] %v303
        %v308 = vld [vmem:[%s222] sm:$0xff]
        %v310 = vcombine.low %v308, %v308
        %v312 = vunpack.c.l.s4 1983009808
        %v313 = vunpack.c.0.s8 %v312
        %v314 = vlaneseq
        %v315 = vshrl.u32 %v314, 7
        %v316 = vsub.s32 %v313, %v315
        %v317 = vrot.slane %v310, %v316
        %v319 = vunpack.c.l.s4 1983009808
        %v320 = vunpack.c.0.s8 %v319
        %v321 = vlaneseq
        %v322 = vshrl.u32 %v321, 7
        %v323 = vsub.s32 %v320, %v322
        %v324 = vrot.slane %v308, %v323
        %325 = vrot.lane.b32.xlu0 %v317, 110
        %v326 = vpop.permute.xlu0 %325
        %327 = vrot.lane.b32.xlu0 %v324, 110
        %v328 = vpop.permute.xlu0 %327
        %v329 = vrot.slane %v326, 4
        %v330 = vrot.slane %v328, 4
        %v331 = vsel %vm268, %v329, %v330
        %vm332 = vcmask 900096
        %v333 = vsel %vm332, %v326, %v331
        %v334 = vsel %vm332, %v328, %v330
        %337 = vst [vmem:[#allocation2 + $0xc] sm:$0xcc] %v333
        %338 = vst [vmem:[#allocation2 + $0x14] sm:$0xc] %v334
        %v339 = vld [vmem:[%s222] sm:$0xff]
        %v341 = vcombine.high %v339, %v339
        %v343 = vunpack.c.l.s4 1983009808
        %v344 = vunpack.c.0.s8 %v343
        %v345 = vlaneseq
        %v346 = vshrl.u32 %v345, 7
        %v347 = vsub.s32 %v344, %v346
        %v348 = vrot.slane %v339, %v347
        %v350 = vunpack.c.l.s4 1983009808
        %v351 = vunpack.c.0.s8 %v350
        %v352 = vlaneseq
        %v353 = vshrl.u32 %v352, 7
        %v354 = vsub.s32 %v351, %v353
        %v355 = vrot.slane %v341, %v354
        %356 = vrot.lane.b32.xlu0 %v348, 109
        %v357 = vpop.permute.xlu0 %356
        %358 = vrot.lane.b32.xlu0 %v355, 109
        %v359 = vpop.permute.xlu0 %358
        %v360 = vrot.slane %v357, 4
        %v361 = vrot.slane %v359, 4
        %v362 = vsel %vm268, %v360, %v361
        %vm363 = vcmask 891904
        %v364 = vsel %vm363, %v357, %v362
        %v365 = vsel %vm363, %v359, %v361
        %368 = vst [vmem:[#allocation2 + $0x18] sm:$0x33] %v364
        %369 = vst [vmem:[#allocation2 + $0x20] sm:$0x3] %v365
        %v370 = vld [vmem:[%s222] sm:$0xff]
        %v372 = vcombine.low %v370, %v370
        %v374 = vunpack.c.l.s4 1983009808
        %v375 = vunpack.c.0.s8 %v374
        %v376 = vlaneseq
        %v377 = vshrl.u32 %v376, 7
        %v378 = vsub.s32 %v375, %v377
        %v379 = vrot.slane %v372, %v378
        %v381 = vunpack.c.l.s4 1983009808
        %v382 = vunpack.c.0.s8 %v381
        %v383 = vlaneseq
        %v384 = vshrl.u32 %v383, 7
        %v385 = vsub.s32 %v382, %v384
        %v386 = vrot.slane %v370, %v385
        %387 = vrot.lane.b32.xlu0 %v379, 108
        %v388 = vpop.permute.xlu0 %387
        %389 = vrot.lane.b32.xlu0 %v386, 108
        %v390 = vpop.permute.xlu0 %389
        %v391 = vrot.slane %v388, 4
        %v392 = vrot.slane %v390, 4
        %v393 = vsel %vm268, %v391, %v392
        %vm394 = vcmask 883712
        %v395 = vsel %vm394, %v388, %v393
        %v396 = vsel %vm394, %v390, %v392
        %399 = vst [vmem:[#allocation2 + $0x18] sm:$0xcc] %v395
        %400 = vst [vmem:[#allocation2 + $0x20] sm:$0xc] %v396
        %v401 = vld [vmem:[%s222] sm:$0xff]
        %v403 = vcombine.high %v401, %v401
        %v405 = vunpack.c.l.s4 1983009808
        %v406 = vunpack.c.0.s8 %v405
        %v407 = vlaneseq
        %v408 = vshrl.u32 %v407, 7
        %v409 = vsub.s32 %v406, %v408
        %v410 = vrot.slane %v401, %v409
        %v412 = vunpack.c.l.s4 1983009808
        %v413 = vunpack.c.0.s8 %v412
        %v414 = vlaneseq
        %v415 = vshrl.u32 %v414, 7
        %v416 = vsub.s32 %v413, %v415
        %v417 = vrot.slane %v403, %v416
        %418 = vrot.lane.b32.xlu0 %v410, 92
        %v419 = vpop.permute.xlu0 %418
        %420 = vrot.lane.b32.xlu0 %v417, 92
        %v421 = vpop.permute.xlu0 %420
        %v422 = vrot.slane %v419, 4
        %v423 = vrot.slane %v421, 4
        %v424 = vsel %vm268, %v422, %v423
        %vm425 = vcmask 752640
        %v426 = vsel %vm425, %v419, %v424
        %v427 = vsel %vm425, %v421, %v423
        %430 = vst [vmem:[#allocation2 + $0x24] sm:$0x33] %v426
        %431 = vst [vmem:[#allocation2 + $0x2c] sm:$0x3] %v427
        %v432 = vld [vmem:[%s222] sm:$0xff]
        %v434 = vcombine.low %v432, %v432
        %v436 = vunpack.c.l.s4 1983009808
        %v437 = vunpack.c.0.s8 %v436
        %v438 = vlaneseq
        %v439 = vshrl.u32 %v438, 7
        %v440 = vsub.s32 %v437, %v439
        %v441 = vrot.slane %v434, %v440
        %v443 = vunpack.c.l.s4 1983009808
        %v444 = vunpack.c.0.s8 %v443
        %v445 = vlaneseq
        %v446 = vshrl.u32 %v445, 7
        %v447 = vsub.s32 %v444, %v446
        %v448 = vrot.slane %v432, %v447
        %449 = vrot.lane.b32.xlu0 %v441, 91
        %v450 = vpop.permute.xlu0 %449
        %451 = vrot.lane.b32.xlu0 %v448, 91
        %v452 = vpop.permute.xlu0 %451
        %v453 = vrot.slane %v450, 4
        %v454 = vrot.slane %v452, 4
        %v455 = vsel %vm268, %v453, %v454
        %vm456 = vcmask 744448
        %v457 = vsel %vm456, %v450, %v455
        %v458 = vsel %vm456, %v452, %v454
        %461 = vst [vmem:[#allocation2 + $0x24] sm:$0xcc] %v457
        %462 = vst [vmem:[#allocation2 + $0x2c] sm:$0xc] %v458
        %v463 = vld [vmem:[%s222] sm:$0xff]
        %v465 = vcombine.high %v463, %v463
        %v467 = vunpack.c.l.s4 1983009808
        %v468 = vunpack.c.0.s8 %v467
        %v469 = vlaneseq
        %v470 = vshrl.u32 %v469, 7
        %v471 = vsub.s32 %v468, %v470
        %v472 = vrot.slane %v463, %v471
        %v474 = vunpack.c.l.s4 1983009808
        %v475 = vunpack.c.0.s8 %v474
        %v476 = vlaneseq
        %v477 = vshrl.u32 %v476, 7
        %v478 = vsub.s32 %v475, %v477
        %v479 = vrot.slane %v465, %v478
        %480 = vrot.lane.b32.xlu0 %v472, 90
        %v481 = vpop.permute.xlu0 %480
        %482 = vrot.lane.b32.xlu0 %v479, 90
        %v483 = vpop.permute.xlu0 %482
        %v484 = vrot.slane %v481, 4
        %v485 = vrot.slane %v483, 4
        %v486 = vsel %vm268, %v484, %v485
        %vm487 = vcmask 736256
        %v488 = vsel %vm487, %v481, %v486
        %v489 = vsel %vm487, %v483, %v485
        %492 = vst [vmem:[#allocation2 + $0x30] sm:$0x33] %v488
        %493 = vst [vmem:[#allocation2 + $0x38] sm:$0x3] %v489
        %v494 = vld [vmem:[%s1] sm:$0xf]
        %v495 = vld [vmem:[%s1 + $0x4] sm:$0xf]
        %v496 = vld [vmem:[%s1 + $0x8] sm:$0xf]
        %v497 = vld [vmem:[%s1 + $0xc] sm:$0xf]
        %v498 = vld [vmem:[#allocation2] sm:$0xff]
        %v499 = vld [vmem:[#allocation2 + $0x8] sm:$0xf]
        %v500 = vld [vmem:[#allocation2 + $0xc] sm:$0xff]
        %v501 = vld [vmem:[#allocation2 + $0x14] sm:$0xf]
        %v502 = vld [vmem:[#allocation2 + $0x18] sm:$0xff]
        %v503 = vld [vmem:[#allocation2 + $0x20] sm:$0xf]
        %v504 = vld [vmem:[#allocation2 + $0x24] sm:$0xff]
        %v505 = vld [vmem:[#allocation2 + $0x2c] sm:$0xf]
        %v506 = vld [vmem:[#allocation2 + $0x30] sm:$0x33]
        %v507 = vld [vmem:[#allocation2 + $0x38] sm:$0x3]
        %v508 = vld [vmem:[%s2] sm:$0xff]
        %v509 = vld [vmem:[%s2 + $0x8] sm:$0xff]
        %v510 = vld [vmem:[%s2 + $0x10] sm:$0xff]
        %v511 = vld [vmem:[%s2 + $0x18] sm:$0xff]
        %513 = vset.pattern.permute.xlu0 0
        %514 = vperm.xlu0 %513, %v508
        %v515 = vpop.permute.xlu0 %514
        %518 = vset.pattern.permute.xlu0 0
        %519 = vperm.xlu0 %518, %v509
        %v520 = vpop.permute.xlu0 %519
        %523 = vset.pattern.permute.xlu0 0
        %524 = vperm.xlu0 %523, %v510
        %v525 = vpop.permute.xlu0 %524
        %528 = vset.pattern.permute.xlu0 0
        %529 = vperm.xlu0 %528, %v511
        %v530 = vpop.permute.xlu0 %529
        %v536 = vunpack.c.l.b16 %v494
        %v537 = vunpack.c.l.b16 %v495
        %v538 = vunpack.c.l.b16 %v496
        %v539 = vunpack.c.l.b16 %v497
        %v540 = vpack.c.b16 %v537, %v536
        %v541 = vpack.c.b16 %v539, %v538
        %v552 = vunpack.c.l.b16 %v498
        %v553 = vunpack.c.h.b16 %v498
        %v554 = vunpack.c.l.b16 %v499
        %v555 = vunpack.c.l.b16 %v500
        %v556 = vunpack.c.h.b16 %v500
        %v557 = vunpack.c.l.b16 %v501
        %v558 = vunpack.c.l.b16 %v502
        %v559 = vunpack.c.h.b16 %v502
        %v560 = vunpack.c.l.b16 %v503
        %v561 = vunpack.c.l.b16 %v504
        %v562 = vunpack.c.h.b16 %v504
        %v563 = vunpack.c.l.b16 %v505
        %v564 = vunpack.c.l.b16 %v506
        %v565 = vunpack.c.h.b16 %v506
        %v566 = vunpack.c.l.b16 %v507
        %v567 = vpack.c.b16 %v555, %v552
        %v568 = vpack.c.b16 %v556, %v553
        %v569 = vpack.c.b16 %v557, %v554
        %v570 = vpack.c.b16 %v561, %v558
        %v571 = vpack.c.b16 %v562, %v559
        %v572 = vpack.c.b16 %v563, %v560
        %v573 = vpack.c.b16 %v564, %v564
        %v574 = vpack.c.b16 %v565, %v565
        %v575 = vpack.c.b16 %v566, %v566
        %vm582 = vcmask 293888
        %v584 = vsel %vm582, %v540, 0
        %v587 = vsel %vm582, %v541, 0
        %vm589 = vcmask 1041408
        %v591 = vsel %vm589, %v573, 0
        %v594 = vsel %vm589, %v574, 0
        %v597 = vsel %vm589, %v575, 0
        %599 = vmatprep.subr.bf16.mxu0 0
        %600 = vmatpush1.bf16.msra.mxu0 0
        %601 = vmatprep.subr.bf16.mxu0 0
        %602 = vmatpush1.bf16.msra.mxu0 0
        %603 = vmatprep.subr.bf16.mxu0 0
        %604 = vmatpush1.bf16.msra.mxu0 0
        %605 = vmatprep.subr.bf16.mxu0 0
        %606 = vmatpush1.bf16.msra.mxu0 0
        %607 = vmatprep.subr.bf16.mxu0 0
        %608 = vmatpush1.bf16.msra.mxu0 0
        %609 = vmatprep.subr.bf16.mxu0 %v594
        %610 = vmatpush1.bf16.msra.mxu0 %v591
        %611 = vmatprep.subr.bf16.mxu0 %v571
        %612 = vmatpush1.bf16.msra.mxu0 %v570
        %613 = vmatprep.subr.bf16.mxu0 %v568
        %614 = vmatpush1.bf16.msra.mxu0 %v567
        %615 = vmatprep.subr.bf16.mxu0 0
        %616 = vmatpush2.bf16.msra.mxu0 0
        %617 = vmatprep.subr.bf16.mxu0 0
        %618 = vmatpush2.bf16.msra.mxu0 0
        %619 = vmatprep.subr.bf16.mxu0 0
        %620 = vmatpush2.bf16.msra.mxu0 0
        %621 = vmatprep.subr.bf16.mxu0 0
        %622 = vmatpush2.bf16.msra.mxu0 0
        %623 = vmatprep.subr.bf16.mxu0 0
        %624 = vmatpush2.bf16.msra.mxu0 0
        %625 = vmatprep.subr.bf16.mxu0 0
        %626 = vmatpush2.bf16.msra.mxu0 0
        %627 = vmatprep.subr.bf16.mxu0 0
        %628 = vmatpush2.bf16.msra.mxu0 0
        %629 = vmatprep.subr.bf16.mxu0 0
        %630 = vmatpush2.bf16.msra.mxu0 0
        %631 = vmatprep.mubr.bf16.mxu0 0
        %632 = vmatmul.mubr.bf16.gmra.mxu0 %v584
        %v633 = vpop.f32.mrf.mxu0
        %v634 = vadd.f32 %v515, %v633
        %v635 = vpop.f32.mrf.mxu0
        %v636 = vadd.f32 %v515, %v635
        %v637 = vpop.f32.mrf.mxu0
        %v638 = vadd.f32 %v520, %v637
        %v639 = vpop.f32.mrf.mxu0
        %v640 = vadd.f32 %v520, %v639
        %641 = vmatprep.mubr.bf16.mxu0 0
        %642 = vmatmul.mubr.bf16.gmra.mxu0 %v587
        %v643 = vpop.f32.mrf.mxu0
        %v644 = vadd.f32 %v525, %v643
        %v645 = vpop.f32.mrf.mxu0
        %v646 = vadd.f32 %v525, %v645
        %v647 = vpop.f32.mrf.mxu0
        %v648 = vadd.f32 %v530, %v647
        %v649 = vpop.f32.mrf.mxu0
        %v650 = vadd.f32 %v530, %v649
        %651 = vdwg.mxu0
        %652 = vmatprep.subr.bf16.mxu0 0
        %653 = vmatpush1.bf16.msra.mxu0 0
        %654 = vmatprep.subr.bf16.mxu0 0
        %655 = vmatpush1.bf16.msra.mxu0 0
        %656 = vmatprep.subr.bf16.mxu0 0
        %657 = vmatpush1.bf16.msra.mxu0 0
        %658 = vmatprep.subr.bf16.mxu0 0
        %659 = vmatpush1.bf16.msra.mxu0 0
        %660 = vmatprep.subr.bf16.mxu0 0
        %661 = vmatpush1.bf16.msra.mxu0 0
        %662 = vmatprep.subr.bf16.mxu0 0
        %663 = vmatpush1.bf16.msra.mxu0 %v597
        %664 = vmatprep.subr.bf16.mxu0 0
        %665 = vmatpush1.bf16.msra.mxu0 %v572
        %666 = vmatprep.subr.bf16.mxu0 0
        %667 = vmatpush1.bf16.msra.mxu0 %v569
        %668 = vmatprep.subr.bf16.mxu0 0
        %669 = vmatpush2.bf16.msra.mxu0 0
        %670 = vmatprep.subr.bf16.mxu0 0
        %671 = vmatpush2.bf16.msra.mxu0 0
        %672 = vmatprep.subr.bf16.mxu0 0
        %673 = vmatpush2.bf16.msra.mxu0 0
        %674 = vmatprep.subr.bf16.mxu0 0
        %675 = vmatpush2.bf16.msra.mxu0 0
        %676 = vmatprep.subr.bf16.mxu0 0
        %677 = vmatpush2.bf16.msra.mxu0 0
        %678 = vmatprep.subr.bf16.mxu0 0
        %679 = vmatpush2.bf16.msra.mxu0 0
        %680 = vmatprep.subr.bf16.mxu0 0
        %681 = vmatpush2.bf16.msra.mxu0 0
        %682 = vmatprep.subr.bf16.mxu0 0
        %683 = vmatpush2.bf16.msra.mxu0 0
        %684 = vmatprep.mubr.bf16.mxu0 0
        %685 = vmatmul.mubr.bf16.gmra.mxu0 %v584
        %v686 = vpop.f32.mrf.mxu0
        %v687 = vadd.f32 %v515, %v686
        %v688 = vpop.f32.mrf.mxu0
        %v689 = vpop.f32.mrf.mxu0
        %v690 = vadd.f32 %v520, %v689
        %v691 = vpop.f32.mrf.mxu0
        %692 = vmatprep.mubr.bf16.mxu0 0
        %693 = vmatmul.mubr.bf16.gmra.mxu0 %v587
        %v694 = vpop.f32.mrf.mxu0
        %v695 = vadd.f32 %v525, %v694
        %v696 = vpop.f32.mrf.mxu0
        %v697 = vpop.f32.mrf.mxu0
        %v698 = vadd.f32 %v530, %v697
        %v699 = vpop.f32.mrf.mxu0
        %700 = vdwg.mxu0
        %v701 = vmax.f32 %v634, 0.0
        %v702 = vmax.f32 %v636, 0.0
        %v703 = vmax.f32 %v687, 0.0
        %v704 = vmax.f32 %v638, 0.0
        %v705 = vmax.f32 %v640, 0.0
        %v706 = vmax.f32 %v690, 0.0
        %v707 = vmax.f32 %v644, 0.0
        %v708 = vmax.f32 %v646, 0.0
        %v709 = vmax.f32 %v695, 0.0
        %v710 = vmax.f32 %v648, 0.0
        %v711 = vmax.f32 %v650, 0.0
        %v712 = vmax.f32 %v698, 0.0
        %v713 = vld [vmem:[%s3] sm:$0xf]
        %v714 = vpack.c.bf16 %v704, %v701
        %v715 = vpack.c.bf16 %v705, %v702
        %v716 = vpack.c.bf16 %v706, %v703
        %v717 = vpack.c.bf16 %v710, %v707
        %v718 = vpack.c.bf16 %v711, %v708
        %v719 = vpack.c.bf16 %v712, %v709
        %v720 = vld [vmem:[%s4] sm:$0xff]
        %722 = vset.pattern.permute.xlu0 0
        %723 = vperm.xlu0 %722, %v720
        %v724 = vpop.permute.xlu0 %723
        %vm726 = vcmask 261120
        %v728 = vsel %vm726, %v713, 0
        %730 = vmatprep.subr.bf16.mxu0 0
        %731 = vmatpush1.bf16.msra.mxu0 0
        %732 = vmatprep.subr.bf16.mxu0 0
        %733 = vmatpush1.bf16.msra.mxu0 0
        %734 = vmatprep.subr.bf16.mxu0 0
        %735 = vmatpush1.bf16.msra.mxu0 0
        %736 = vmatprep.subr.bf16.mxu0 0
        %737 = vmatpush1.bf16.msra.mxu0 0
        %738 = vmatprep.subr.bf16.mxu0 0
        %739 = vmatpush1.bf16.msra.mxu0 0
        %740 = vmatprep.subr.bf16.mxu0 0
        %741 = vmatpush1.bf16.msra.mxu0 0
        %742 = vmatprep.subr.bf16.mxu0 %v718
        %743 = vmatpush1.bf16.msra.mxu0 %v717
        %744 = vmatprep.subr.bf16.mxu0 %v715
        %745 = vmatpush1.bf16.msra.mxu0 %v714
        %746 = vmatprep.subr.bf16.mxu0 0
        %747 = vmatpush2.bf16.msra.mxu0 0
        %748 = vmatprep.subr.bf16.mxu0 0
        %749 = vmatpush2.bf16.msra.mxu0 0
        %750 = vmatprep.subr.bf16.mxu0 0
        %751 = vmatpush2.bf16.msra.mxu0 0
        %752 = vmatprep.subr.bf16.mxu0 0
        %753 = vmatpush2.bf16.msra.mxu0 0
        %754 = vmatprep.subr.bf16.mxu0 0
        %755 = vmatpush2.bf16.msra.mxu0 0
        %756 = vmatprep.subr.bf16.mxu0 0
        %757 = vmatpush2.bf16.msra.mxu0 0
        %758 = vmatprep.subr.bf16.mxu0 0
        %759 = vmatpush2.bf16.msra.mxu0 0
        %760 = vmatprep.subr.bf16.mxu0 0
        %761 = vmatpush2.bf16.msra.mxu0 0
        %762 = vmatprep.mubr.bf16.mxu0 0
        %763 = vmatmul.mubr.bf16.gmra.mxu0 %v728
        %v764 = vpop.f32.mrf.mxu0
        %v765 = vadd.f32 %v724, %v764
        %v766 = vpop.f32.mrf.mxu0
        %v767 = vadd.f32 %v724, %v766
        %v768 = vpop.f32.mrf.mxu0
        %v769 = vpop.f32.mrf.mxu0
        %770 = vdwg.mxu0
        %771 = vmatprep.subr.bf16.mxu0 0
        %772 = vmatpush1.bf16.msra.mxu0 0
        %773 = vmatprep.subr.bf16.mxu0 0
        %774 = vmatpush1.bf16.msra.mxu0 0
        %775 = vmatprep.subr.bf16.mxu0 0
        %776 = vmatpush1.bf16.msra.mxu0 0
        %777 = vmatprep.subr.bf16.mxu0 0
        %778 = vmatpush1.bf16.msra.mxu0 0
        %779 = vmatprep.subr.bf16.mxu0 0
        %780 = vmatpush1.bf16.msra.mxu0 0
        %781 = vmatprep.subr.bf16.mxu0 0
        %782 = vmatpush1.bf16.msra.mxu0 0
        %783 = vmatprep.subr.bf16.mxu0 0
        %784 = vmatpush1.bf16.msra.mxu0 %v719
        %785 = vmatprep.subr.bf16.mxu0 0
        %786 = vmatpush1.bf16.msra.mxu0 %v716
        %787 = vmatprep.subr.bf16.mxu0 0
        %788 = vmatpush2.bf16.msra.mxu0 0
        %789 = vmatprep.subr.bf16.mxu0 0
        %790 = vmatpush2.bf16.msra.mxu0 0
        %791 = vmatprep.subr.bf16.mxu0 0
        %792 = vmatpush2.bf16.msra.mxu0 0
        %793 = vmatprep.subr.bf16.mxu0 0
        %794 = vmatpush2.bf16.msra.mxu0 0
        %795 = vmatprep.subr.bf16.mxu0 0
        %796 = vmatpush2.bf16.msra.mxu0 0
        %797 = vmatprep.subr.bf16.mxu0 0
        %798 = vmatpush2.bf16.msra.mxu0 0
        %799 = vmatprep.subr.bf16.mxu0 0
        %800 = vmatpush2.bf16.msra.mxu0 0
        %801 = vmatprep.subr.bf16.mxu0 0
        %802 = vmatpush2.bf16.msra.mxu0 0
        %803 = vmatprep.mubr.bf16.mxu0 0
        %804 = vmatmul.mubr.bf16.gmra.mxu0 %v728
        %v805 = vpop.f32.mrf.mxu0
        %v806 = vadd.f32 %v724, %v805
        %v807 = vpop.f32.mrf.mxu0
        %v808 = vpop.f32.mrf.mxu0
        %v809 = vpop.f32.mrf.mxu0
        %810 = vdwg.mxu0
        %v811 = vpack.c.bf16 %v765, %v765
        %v812 = vpack.c.bf16 %v767, %v767
        %v813 = vpack.c.bf16 %v806, %v806
        %v817 = vunpack.c.l.b16 %v811
        %v818 = vunpack.c.l.b16 %v812
        %v819 = vunpack.c.l.b16 %v813
        %v820 = vpack.c.b16 %v818, %v817
        %v821 = vpack.c.b16 %v819, %v819
        %824 = vst [vmem:[%s217] sm:$0xff] %v820
        %825 = vst [vmem:[%s217 + $0x8] sm:$0xf] %v821
        %s826 = sand.u32 %s137, 1
        %s827 = scalar_lea.sflag [#allocation4], %s826
        %s828 = sand.u32 %s137, 1
        %s829 = smul.addr %s828, 12
        %s830 = scalar_lea.vmem [#allocation3], %s829
        // Predicated region
        $region41: #{tpu_custom_call.1} parent=39 // pred_check
          %p831 = pneg %p147
        $region42: #{tpu_custom_call.1} parent=39 // pred_check_branch
          %833 = sbr.rel (%p831) target = $region44
        $region43: #{tpu_custom_call.1} parent=39 // pred_region
          %s835 = ssub.s32 192, 192
          %836 = vsyncadd %s827, %s835
          %s837 = smul.addr %s19, 3
          %s838 = smul.addr %s837, 64
          %s839 = scalar_lea.hbm %s5, %s838
          %s841 = sshll.u32 %s830, 4
          %s842 = int_to_ptr.vmem [resolvable:$true] %s841
          %844 = dma.vmem_to_hbm [thread:$0]  %s842, 192, %s839, %s827
        $region44: #{tpu_custom_call.1} parent=39 // pred_fallthru
          _
      $region40: #{tpu_custom_call.1} parent=5 // pred_fallthru
        _
      %p845 = scmp.le.s32.totalorder 2, %s14
      // Predicated region
      $region45: #{tpu_custom_call.1} parent=5 // pred_check
        %p846 = pneg %p845
      $region46: #{tpu_custom_call.1} parent=5 // pred_check_branch
        %848 = sbr.rel (%p846) target = $region48
      $region47: #{tpu_custom_call.1} parent=5 // pred_region
        %s849 = ssub.s32 %s14, 2
        // Predicated region
        $region49: #{tpu_custom_call.1} parent=47 // pred_check
          %p850 = pneg %p153
        $region50: #{tpu_custom_call.1} parent=47 // pred_check_branch
          %852 = sbr.rel (%p850) target = $region52
        $region51: #{tpu_custom_call.1} parent=47 // pred_region
          %s853 = sand.u32 %s138, 1
          %s854 = scalar_lea.sflag [#allocation4], %s853
          %s855 = sand.u32 %s138, 1
          %s856 = smul.addr %s855, 12
          %s857 = scalar_lea.vmem [#allocation3], %s856
          %858 = dma.done %s854, 192
        $region52: #{tpu_custom_call.1} parent=47 // pred_fallthru
          _
      $region48: #{tpu_custom_call.1} parent=5 // pred_fallthru
        _
    $region6: #{tpu_custom_call.1} parent=1 // loop_footer
      %s18 = sadd.s32 1, %s14
    $region7: #{tpu_custom_call.1} parent=1 // loop_footer_branch
      %13 = sbr.rel target = $region3
    $region8: #{tpu_custom_call.1} parent=1 // loop_exit
      _
    %859 = vsyncpa [#allocation4], 1
    %s860 = scalar_lea.sflag [#allocation4], 1
    %861 = vsyncpa %s860, 1

</llo_original>
